<compile_context>
chip_gen: v7x
topology: tpu7x:2x2x1
jax: 0.10.0
libtpu: 0.0.40
codegen_flags: <defaults>
</compile_context>

<pallas_src>
import jax
import jax.numpy as jnp
from jax.experimental import pallas as pl
from jax.experimental.pallas import tpu as pltpu


def _conv1x1_vpu_kernel(w_ref, x_ref, o_ref, *, chunk=2048):
    """Small-C path: per-pixel channel mix on the VPU.

    w_ref: (C, C) f32 weights resident in SMEM (scalar reads).
    x_ref, o_ref: (1, C, TS) VMEM tiles of the (N, C, H*W) tensor.
    """
    _, c, ts = x_ref.shape
    # Walk the spatial tile in lane chunks so live vregs stay bounded even
    # when TS is tens of thousands of lanes.  Static Python loop: trip count
    # is small by construction of the tile size, so full unrolling is cheap
    # and gives the scheduler full visibility.
    for s0 in range(0, ts, chunk):
        cs = min(chunk, ts - s0)
        xs = x_ref[0, :, pl.ds(s0, cs)]                 # (C, cs) vector load
        for o in range(c):
            acc = w_ref[o, 0] * xs[0]                   # SMEM scalar * VPU vector
            for i in range(1, c):
                acc = acc + w_ref[o, i] * xs[i]
            o_ref[0, o, pl.ds(s0, cs)] = acc.astype(o_ref.dtype)


def _conv1x1_mxu_kernel(w_ref, x_ref, o_ref):
    """Larger-C path: (C, C) x (C, TS) channel mix on the (otherwise idle) MXU."""
    o_ref[0] = jnp.dot(
        w_ref[...], x_ref[0], preferred_element_type=jnp.float32
    ).astype(o_ref.dtype)


def _spatial_tile(hw, c, itemsize, target_block_bytes=1 << 20):
    """Lane-dense spatial tile: full extent if it fits, else a multiple of 128
    sized so one (C, TS) block is ~1 MiB (amortizes per-grid-step overhead)."""
    lanes = (target_block_bytes // (c * itemsize)) // 128 * 128
    lanes = max(lanes, 128)
    return hw if hw <= lanes else lanes


def inv_convolution_forward(x, weights):
    """x: (N, C, H, W), weights: (C, C) -> (conv1x1(x), slogdet(W)[1] * H * W)."""
    n, c, h, w = x.shape
    hw = h * w
    itemsize = jnp.dtype(x.dtype).itemsize

    # NCHW -> (N, C, H*W): contiguous reshape, no transpose, no extra HBM pass.
    x3 = x.reshape(n, c, hw)

    ts = _spatial_tile(hw, c, itemsize)
    grid = (n, pl.cdiv(hw, ts))          # ragged last tile handled by Pallas

    x_spec = pl.BlockSpec((1, c, ts), lambda b, s: (b, 0, s))
    o_spec = pl.BlockSpec((1, c, ts), lambda b, s: (b, 0, s))

    if c <= 8:
        # Tiny (C, C) weight lives in SMEM; channel mix runs on the VPU.
        kernel = _conv1x1_vpu_kernel
        w_spec = pl.BlockSpec(memory_space=pltpu.MemorySpace.SMEM)
    else:
        # Weights resident in VMEM; channel mix runs on the MXU.
        kernel = _conv1x1_mxu_kernel
        w_spec = pl.BlockSpec((c, c), lambda b, s: (0, 0))

    out3 = pl.pallas_call(
        kernel,
        out_shape=jax.ShapeDtypeStruct((n, c, hw), x.dtype),
        grid_spec=pltpu.PrefetchScalarGridSpec(
            num_scalar_prefetch=0,
            grid=grid,
            in_specs=[w_spec, x_spec],
            out_specs=o_spec,
        ),
        compiler_params=pltpu.CompilerParams(
            dimension_semantics=("parallel", "parallel"),
        ),
        cost_estimate=pl.CostEstimate(
            flops=2 * n * hw * c * c,
            transcendentals=0,
            bytes_accessed=2 * n * c * hw * itemsize + c * c * itemsize,
        ),
    )(weights.astype(jnp.float32), x3)

    # (N, C, H*W) -> NCHW: contiguous reshape, free.
    out = out3.reshape(n, c, h, w)

    # TODO(synk): slogdet of the tiny (C, C) weight is parameter-only glue;
    # kept in plain JAX rather than re-implementing an LU factorization in-kernel.
    log_det = jnp.linalg.slogdet(weights)[1] * h * w
    return out, log_det


if __name__ == "__main__":
    key = jax.random.PRNGKey(0)
    k_w, k_x, k_w2, k_x2 = jax.random.split(key, 4)

    # ---- Small-C (VPU / SMEM-scalar) path: the module's default usage. ----
    N, C, H, W = 2, 4, 16, 16

    # Deterministic parameter init, mirroring torch.qr(torch.randn(c, c))[0]
    w_raw = jax.random.normal(k_w, (C, C), dtype=jnp.float32)
    weights, _ = jnp.linalg.qr(w_raw)
    x = jax.random.normal(k_x, (N, C, H, W), dtype=jnp.float32)

    out, log_det = inv_convolution_forward(x, weights)
    out = jax.block_until_ready(out)
    log_det = jax.block_until_ready(log_det)

    ref = jnp.einsum("oi,nihw->nohw", weights, x)
    ref_ld = jnp.linalg.slogdet(weights)[1] * H * W
    assert out.shape == (N, C, H, W) and out.dtype == x.dtype
    assert jnp.allclose(out, ref, atol=1e-5, rtol=1e-5)
    assert jnp.allclose(log_det, ref_ld, atol=1e-5, rtol=1e-5)

    # ---- Larger-C (MXU) path. ----
    C2 = 32
    w2_raw = jax.random.normal(k_w2, (C2, C2), dtype=jnp.float32)
    weights2, _ = jnp.linalg.qr(w2_raw)
    x2 = jax.random.normal(k_x2, (N, C2, H, W), dtype=jnp.float32)

    out2, log_det2 = inv_convolution_forward(x2, weights2)
    out2 = jax.block_until_ready(out2)
    log_det2 = jax.block_until_ready(log_det2)

    ref2 = jnp.einsum("oi,nihw->nohw", weights2, x2)
    ref_ld2 = jnp.linalg.slogdet(weights2)[1] * H * W
    # Looser tolerance: MXU f32 matmul may use reduced-precision passes.
    assert jnp.allclose(out2, ref2, atol=2e-2, rtol=2e-2)
    assert jnp.allclose(log_det2, ref_ld2, atol=1e-4, rtol=1e-4)

    print("KERNEL_OK")
</pallas_src>

<mosaic_0001>
module attributes {stable_mosaic.version = 11 : i64} {
  func.func @_conv1x1_vpu_kernel(%arg0: i32, %arg1: i32, %arg2: memref<4x4xf32, #tpu.memory_space<smem>>, %arg3: memref<1x4x256xf32, #tpu.memory_space<vmem>>, %arg4: memref<1x4x256xf32, #tpu.memory_space<vmem>>) attributes {dimension_semantics = [#tpu.dimension_semantics<parallel>, #tpu.dimension_semantics<parallel>], iteration_bounds = array<i64: 2, 1>, scalar_prefetch = 0 : i64, scratch_operands = 0 : i64, tpu.core_type = #tpu.core_type<tc>, window_params = [{transform_indices = @transform_0, window_bounds = array<i64: 4, 4>}, {transform_indices = @transform_1, window_bounds = array<i64: 1, 4, 256>}, {transform_indices = @transform_2, window_bounds = array<i64: 1, 4, 256>}]} {
    %c0 = arith.constant 0 : index
    %c0_0 = arith.constant 0 : index
    %c0_1 = arith.constant 0 : index
    %0 = vector.load %arg3[%c0, %c0_0, %c0_1] : memref<1x4x256xf32, #tpu.memory_space<vmem>>, vector<1x4x256xf32>
    %1 = vector.shape_cast %0 : vector<1x4x256xf32> to vector<4x256xf32>
    %c0_2 = arith.constant 0 : index
    %c0_3 = arith.constant 0 : index
    %2 = memref.load %arg2[%c0_2, %c0_3] : memref<4x4xf32, #tpu.memory_space<smem>>
    %3 = vector.extract_strided_slice %1 {offsets = [0, 0], sizes = [1, 256], strides = [1, 1]} : vector<4x256xf32> to vector<1x256xf32>
    %4 = vector.shape_cast %3 : vector<1x256xf32> to vector<256xf32>
    %5 = vector.broadcast %2 : f32 to vector<256xf32>
    %6 = arith.mulf %5, %4 : vector<256xf32>
    %c0_4 = arith.constant 0 : index
    %c1 = arith.constant 1 : index
    %7 = memref.load %arg2[%c0_4, %c1] : memref<4x4xf32, #tpu.memory_space<smem>>
    %8 = vector.extract_strided_slice %1 {offsets = [1, 0], sizes = [1, 256], strides = [1, 1]} : vector<4x256xf32> to vector<1x256xf32>
    %9 = vector.shape_cast %8 : vector<1x256xf32> to vector<256xf32>
    %10 = vector.broadcast %7 : f32 to vector<256xf32>
    %11 = arith.mulf %10, %9 : vector<256xf32>
    %12 = arith.addf %6, %11 : vector<256xf32>
    %c0_5 = arith.constant 0 : index
    %c2 = arith.constant 2 : index
    %13 = memref.load %arg2[%c0_5, %c2] : memref<4x4xf32, #tpu.memory_space<smem>>
    %14 = vector.extract_strided_slice %1 {offsets = [2, 0], sizes = [1, 256], strides = [1, 1]} : vector<4x256xf32> to vector<1x256xf32>
    %15 = vector.shape_cast %14 : vector<1x256xf32> to vector<256xf32>
    %16 = vector.broadcast %13 : f32 to vector<256xf32>
    %17 = arith.mulf %16, %15 : vector<256xf32>
    %18 = arith.addf %12, %17 : vector<256xf32>
    %c0_6 = arith.constant 0 : index
    %c3 = arith.constant 3 : index
    %19 = memref.load %arg2[%c0_6, %c3] : memref<4x4xf32, #tpu.memory_space<smem>>
    %20 = vector.extract_strided_slice %1 {offsets = [3, 0], sizes = [1, 256], strides = [1, 1]} : vector<4x256xf32> to vector<1x256xf32>
    %21 = vector.shape_cast %20 : vector<1x256xf32> to vector<256xf32>
    %22 = vector.broadcast %19 : f32 to vector<256xf32>
    %23 = arith.mulf %22, %21 : vector<256xf32>
    %24 = arith.addf %18, %23 : vector<256xf32>
    %c0_7 = arith.constant 0 : index
    %c0_8 = arith.constant 0 : index
    %c0_9 = arith.constant 0 : index
    %25 = vector.load %arg4[%c0_7, %c0_8, %c0_9] : memref<1x4x256xf32, #tpu.memory_space<vmem>>, vector<1x1x256xf32>
    %26 = vector.shape_cast %25 : vector<1x1x256xf32> to vector<256xf32>
    %27 = vector.shape_cast %24 : vector<256xf32> to vector<1x1x256xf32>
    tpu.vector_store %arg4[%c0_7, %c0_8, %c0_9], %27 {strides = array<i32>} : memref<1x4x256xf32, #tpu.memory_space<vmem>>, vector<1x1x256xf32>,
    %c1_10 = arith.constant 1 : index
    %c0_11 = arith.constant 0 : index
    %28 = memref.load %arg2[%c1_10, %c0_11] : memref<4x4xf32, #tpu.memory_space<smem>>
    %29 = vector.extract_strided_slice %1 {offsets = [0, 0], sizes = [1, 256], strides = [1, 1]} : vector<4x256xf32> to vector<1x256xf32>
    %30 = vector.shape_cast %29 : vector<1x256xf32> to vector<256xf32>
    %31 = vector.broadcast %28 : f32 to vector<256xf32>
    %32 = arith.mulf %31, %30 : vector<256xf32>
    %c1_12 = arith.constant 1 : index
    %c1_13 = arith.constant 1 : index
    %33 = memref.load %arg2[%c1_12, %c1_13] : memref<4x4xf32, #tpu.memory_space<smem>>
    %34 = vector.extract_strided_slice %1 {offsets = [1, 0], sizes = [1, 256], strides = [1, 1]} : vector<4x256xf32> to vector<1x256xf32>
    %35 = vector.shape_cast %34 : vector<1x256xf32> to vector<256xf32>
    %36 = vector.broadcast %33 : f32 to vector<256xf32>
    %37 = arith.mulf %36, %35 : vector<256xf32>
    %38 = arith.addf %32, %37 : vector<256xf32>
    %c1_14 = arith.constant 1 : index
    %c2_15 = arith.constant 2 : index
    %39 = memref.load %arg2[%c1_14, %c2_15] : memref<4x4xf32, #tpu.memory_space<smem>>
    %40 = vector.extract_strided_slice %1 {offsets = [2, 0], sizes = [1, 256], strides = [1, 1]} : vector<4x256xf32> to vector<1x256xf32>
    %41 = vector.shape_cast %40 : vector<1x256xf32> to vector<256xf32>
    %42 = vector.broadcast %39 : f32 to vector<256xf32>
    %43 = arith.mulf %42, %41 : vector<256xf32>
    %44 = arith.addf %38, %43 : vector<256xf32>
    %c1_16 = arith.constant 1 : index
    %c3_17 = arith.constant 3 : index
    %45 = memref.load %arg2[%c1_16, %c3_17] : memref<4x4xf32, #tpu.memory_space<smem>>
    %46 = vector.extract_strided_slice %1 {offsets = [3, 0], sizes = [1, 256], strides = [1, 1]} : vector<4x256xf32> to vector<1x256xf32>
    %47 = vector.shape_cast %46 : vector<1x256xf32> to vector<256xf32>
    %48 = vector.broadcast %45 : f32 to vector<256xf32>
    %49 = arith.mulf %48, %47 : vector<256xf32>
    %50 = arith.addf %44, %49 : vector<256xf32>
    %c0_18 = arith.constant 0 : index
    %c1_19 = arith.constant 1 : index
    %c0_20 = arith.constant 0 : index
    %51 = vector.load %arg4[%c0_18, %c1_19, %c0_20] : memref<1x4x256xf32, #tpu.memory_space<vmem>>, vector<1x1x256xf32>
    %52 = vector.shape_cast %51 : vector<1x1x256xf32> to vector<256xf32>
    %53 = vector.shape_cast %50 : vector<256xf32> to vector<1x1x256xf32>
    tpu.vector_store %arg4[%c0_18, %c1_19, %c0_20], %53 {strides = array<i32>} : memref<1x4x256xf32, #tpu.memory_space<vmem>>, vector<1x1x256xf32>,
    %c2_21 = arith.constant 2 : index
    %c0_22 = arith.constant 0 : index
    %54 = memref.load %arg2[%c2_21, %c0_22] : memref<4x4xf32, #tpu.memory_space<smem>>
    %55 = vector.extract_strided_slice %1 {offsets = [0, 0], sizes = [1, 256], strides = [1, 1]} : vector<4x256xf32> to vector<1x256xf32>
    %56 = vector.shape_cast %55 : vector<1x256xf32> to vector<256xf32>
    %57 = vector.broadcast %54 : f32 to vector<256xf32>
    %58 = arith.mulf %57, %56 : vector<256xf32>
    %c2_23 = arith.constant 2 : index
    %c1_24 = arith.constant 1 : index
    %59 = memref.load %arg2[%c2_23, %c1_24] : memref<4x4xf32, #tpu.memory_space<smem>>
    %60 = vector.extract_strided_slice %1 {offsets = [1, 0], sizes = [1, 256], strides = [1, 1]} : vector<4x256xf32> to vector<1x256xf32>
    %61 = vector.shape_cast %60 : vector<1x256xf32> to vector<256xf32>
    %62 = vector.broadcast %59 : f32 to vector<256xf32>
    %63 = arith.mulf %62, %61 : vector<256xf32>
    %64 = arith.addf %58, %63 : vector<256xf32>
    %c2_25 = arith.constant 2 : index
    %c2_26 = arith.constant 2 : index
    %65 = memref.load %arg2[%c2_25, %c2_26] : memref<4x4xf32, #tpu.memory_space<smem>>
    %66 = vector.extract_strided_slice %1 {offsets = [2, 0], sizes = [1, 256], strides = [1, 1]} : vector<4x256xf32> to vector<1x256xf32>
    %67 = vector.shape_cast %66 : vector<1x256xf32> to vector<256xf32>
    %68 = vector.broadcast %65 : f32 to vector<256xf32>
    %69 = arith.mulf %68, %67 : vector<256xf32>
    %70 = arith.addf %64, %69 : vector<256xf32>
    %c2_27 = arith.constant 2 : index
    %c3_28 = arith.constant 3 : index
    %71 = memref.load %arg2[%c2_27, %c3_28] : memref<4x4xf32, #tpu.memory_space<smem>>
    %72 = vector.extract_strided_slice %1 {offsets = [3, 0], sizes = [1, 256], strides = [1, 1]} : vector<4x256xf32> to vector<1x256xf32>
    %73 = vector.shape_cast %72 : vector<1x256xf32> to vector<256xf32>
    %74 = vector.broadcast %71 : f32 to vector<256xf32>
    %75 = arith.mulf %74, %73 : vector<256xf32>
    %76 = arith.addf %70, %75 : vector<256xf32>
    %c0_29 = arith.constant 0 : index
    %c2_30 = arith.constant 2 : index
    %c0_31 = arith.constant 0 : index
    %77 = vector.load %arg4[%c0_29, %c2_30, %c0_31] : memref<1x4x256xf32, #tpu.memory_space<vmem>>, vector<1x1x256xf32>
    %78 = vector.shape_cast %77 : vector<1x1x256xf32> to vector<256xf32>
    %79 = vector.shape_cast %76 : vector<256xf32> to vector<1x1x256xf32>
    tpu.vector_store %arg4[%c0_29, %c2_30, %c0_31], %79 {strides = array<i32>} : memref<1x4x256xf32, #tpu.memory_space<vmem>>, vector<1x1x256xf32>,
    %c3_32 = arith.constant 3 : index
    %c0_33 = arith.constant 0 : index
    %80 = memref.load %arg2[%c3_32, %c0_33] : memref<4x4xf32, #tpu.memory_space<smem>>
    %81 = vector.extract_strided_slice %1 {offsets = [0, 0], sizes = [1, 256], strides = [1, 1]} : vector<4x256xf32> to vector<1x256xf32>
    %82 = vector.shape_cast %81 : vector<1x256xf32> to vector<256xf32>
    %83 = vector.broadcast %80 : f32 to vector<256xf32>
    %84 = arith.mulf %83, %82 : vector<256xf32>
    %c3_34 = arith.constant 3 : index
    %c1_35 = arith.constant 1 : index
    %85 = memref.load %arg2[%c3_34, %c1_35] : memref<4x4xf32, #tpu.memory_space<smem>>
    %86 = vector.extract_strided_slice %1 {offsets = [1, 0], sizes = [1, 256], strides = [1, 1]} : vector<4x256xf32> to vector<1x256xf32>
    %87 = vector.shape_cast %86 : vector<1x256xf32> to vector<256xf32>
    %88 = vector.broadcast %85 : f32 to vector<256xf32>
    %89 = arith.mulf %88, %87 : vector<256xf32>
    %90 = arith.addf %84, %89 : vector<256xf32>
    %c3_36 = arith.constant 3 : index
    %c2_37 = arith.constant 2 : index
    %91 = memref.load %arg2[%c3_36, %c2_37] : memref<4x4xf32, #tpu.memory_space<smem>>
    %92 = vector.extract_strided_slice %1 {offsets = [2, 0], sizes = [1, 256], strides = [1, 1]} : vector<4x256xf32> to vector<1x256xf32>
    %93 = vector.shape_cast %92 : vector<1x256xf32> to vector<256xf32>
    %94 = vector.broadcast %91 : f32 to vector<256xf32>
    %95 = arith.mulf %94, %93 : vector<256xf32>
    %96 = arith.addf %90, %95 : vector<256xf32>
    %c3_38 = arith.constant 3 : index
    %c3_39 = arith.constant 3 : index
    %97 = memref.load %arg2[%c3_38, %c3_39] : memref<4x4xf32, #tpu.memory_space<smem>>
    %98 = vector.extract_strided_slice %1 {offsets = [3, 0], sizes = [1, 256], strides = [1, 1]} : vector<4x256xf32> to vector<1x256xf32>
    %99 = vector.shape_cast %98 : vector<1x256xf32> to vector<256xf32>
    %100 = vector.broadcast %97 : f32 to vector<256xf32>
    %101 = arith.mulf %100, %99 : vector<256xf32>
    %102 = arith.addf %96, %101 : vector<256xf32>
    %c0_40 = arith.constant 0 : index
    %c3_41 = arith.constant 3 : index
    %c0_42 = arith.constant 0 : index
    %103 = vector.load %arg4[%c0_40, %c3_41, %c0_42] : memref<1x4x256xf32, #tpu.memory_space<vmem>>, vector<1x1x256xf32>
    %104 = vector.shape_cast %103 : vector<1x1x256xf32> to vector<256xf32>
    %105 = vector.shape_cast %102 : vector<256xf32> to vector<1x1x256xf32>
    tpu.vector_store %arg4[%c0_40, %c3_41, %c0_42], %105 {strides = array<i32>} : memref<1x4x256xf32, #tpu.memory_space<vmem>>, vector<1x1x256xf32>,
    return
  }
  func.func @transform_0(%arg0: i32, %arg1: i32) -> (i32, i32) {
    %c0_i32 = arith.constant 0 : i32
    %c0_i32_0 = arith.constant 0 : i32
    %c0_i32_1 = arith.constant 0 : i32
    return %c0_i32, %c0_i32_0 : i32, i32
  }
  func.func @transform_1(%arg0: i32, %arg1: i32) -> (i32, i32, i32) {
    %c0_i32 = arith.constant 0 : i32
    %c0_i32_0 = arith.constant 0 : i32
    return %arg0, %c0_i32, %arg1 : i32, i32, i32
  }
  func.func @transform_2(%arg0: i32, %arg1: i32) -> (i32, i32, i32) {
    %c0_i32 = arith.constant 0 : i32
    %c0_i32_0 = arith.constant 0 : i32
    return %arg0, %c0_i32, %arg1 : i32, i32, i32
  }
}

</mosaic_0001>

<llo_original>
// kernel: tpu_custom_call.1
$region0: #{tpu_custom_call.1}
  #allocation0 [shape = 'u32[]', space=smem, size = 0x4, offset = 0x4, fixed_abs, tag = 'smem constant byte address 0x4 - core index']
  #allocation1 [shape = 'u32[144,128]{1,0:T(1,128)}', space=vmem, size = 0x12000, scoped, tag = 'internal scratch']
  %s0 = inlined_call_operand.hbm [shape: f32[4,4], index: 0, kind: input, shape index: {}]
  %s1 = inlined_call_operand.hbm [shape: f32[2,4,256], index: 1, kind: input, shape index: {}]
  %s2 = inlined_call_operand.hbm [shape: f32[2,4,256], index: 2, kind: output, shape index: {}]
  %s3 = sld [smem:[#allocation0]]
  $region49: #{tpu_custom_call.1} parent=0
    _
  %s5 = ssub.s32 1, %s3
  %s6 = scalar_select 0, %s5, %s3
  $region1: #{tpu_custom_call.1} parent=0
    #allocation2 [shape = 'u8[2048]{0}', space=smem, size = 0x800, scoped, tag = 'input window, operand 0, single buffered']
    #allocation3 [shape = 's32[2]{0}', space=sflag, size = 0x8, scoped, tag = 'scoped memory for tpu_custom_call.1']
    #allocation4 [shape = 's32[2]{0}', space=sflag, size = 0x8, scoped, tag = 'scoped memory for tpu_custom_call.1']
    #allocation5 [shape = 's32[2]{0}', space=sflag, size = 0x8, scoped, tag = 'scoped memory for tpu_custom_call.1']
    #allocation6 [shape = 'u8[8192]{0}', space=vmem, size = 0x2000, scoped, tag = 'input window, operand 1']
    #allocation7 [shape = 'u8[8192]{0}', space=vmem, size = 0x2000, scoped, tag = 'output window, operand 0']
    %7 = vsyncpa [#allocation5], 0
    %8 = vsyncpa [#allocation3], 0
    %s9 = scalar_lea.sflag [#allocation3], 1
    %10 = vsyncpa %s9, 0
    %11 = vsyncpa [#allocation4], 0
    %s12 = scalar_lea.sflag [#allocation4], 1
    %13 = vsyncpa %s12, 0
    loop: start=0, step=1, limit=4
    $region2: #{tpu_custom_call.1} parent=1 // loop_pre_header
      _
    $region3: #{tpu_custom_call.1} parent=1 // loop_header
      %s15 = sphi 0, %s19
      %p16 = scmp.ge.s32.totalorder %s15, 4
      %s22 = sphi 0, %s34
      %s23 = sphi 0, %s30
      %s24 = sphi 0, %s22
      %s25 = sphi 0, %s23
      %s26 = sphi 0, %s24
      %s27 = sphi 0, %s25
      %s35 = sphi 0, %s35
      %s37 = sphi 0, %s35
      %s38 = sphi 0, %s37
      %s52 = sphi 0, %s38
      %s60 = sphi 0, %s62
      %s63 = sphi 0, %s60
      %s64 = sphi 0, %s63
      %s80 = sphi 0, %s64
      %s88 = sphi 0, %s90
      %s91 = sphi 0, %s88
      %s92 = sphi 0, %s91
      %s108 = sphi 0, %s92
    $region4: #{tpu_custom_call.1} parent=1 // loop_header_branch
      %18 = sbr.rel (%p16) target = $region8
    $region5: #{tpu_custom_call.1} parent=1 // loop_body
      %s20 = ssub.s32 %s15, 1
      %s21 = ssub.s32 %s15, 2
      %s28 = sadd.s32 1, %s23
      %p29 = scmp.ge.s32.totalorder %s28, 1
      %s30 = scalar_select %p29, 0, %s28
      %s31 = sadd.s32 1, %s22
      %s32 = scalar_select %p29, %s31, %s22
      %p33 = scmp.ge.s32.totalorder %s32, 2
      %s34 = scalar_select %p33, 0, %s32
      %s36 = sadd.s32 %s35, 1
      %p39 = scmp.eq.s32.totalorder %s15, 1
      %p40 = scmp.ne.s32.totalorder %s35, %s37
      %p41 = scmp.eq.s32.totalorder %s15, 0
      %p42 = por %p40, %p41
      %p43 = scmp.ne.s32.totalorder %s35, %s37
      %p44 = scmp.eq.s32.totalorder %s20, 1
      %p45 = por %p43, %p44
      %p46 = scmp.ne.s32.totalorder %s37, %s38
      %p47 = scmp.eq.s32.totalorder %s20, 0
      %p48 = por %p46, %p47
      %p49 = scmp.ne.s32.totalorder %s37, %s38
      %p50 = scmp.eq.s32.totalorder %s21, 1
      %p51 = por %p49, %p50
      %p53 = scmp.ne.s32.totalorder %s38, %s52
      %p54 = scmp.eq.s32.totalorder %s21, 0
      %p55 = por %p53, %p54
      %s56 = ssub.s32 %s22, %s34
      %s57 = ssub.s32 %s23, %s30
      %s58 = sor.u32 %s56, %s57
      %p59 = scmp.eq.s32.totalorder %s58, 0
      %s61 = sadd.s32 %s60, 1
      %s62 = scalar_select %p59, %s60, %s61
      %p65 = pneg %p59
      %p66 = scmp.eq.s32.totalorder %s15, 1
      %p67 = por %p65, %p66
      %p68 = scmp.ne.s32.totalorder %s60, %s63
      %p69 = scmp.eq.s32.totalorder %s15, 0
      %p70 = por %p68, %p69
      %p71 = scmp.ne.s32.totalorder %s60, %s63
      %p72 = scmp.eq.s32.totalorder %s20, 1
      %p73 = por %p71, %p72
      %p74 = scmp.ne.s32.totalorder %s63, %s64
      %p75 = scmp.eq.s32.totalorder %s20, 0
      %p76 = por %p74, %p75
      %p77 = scmp.ne.s32.totalorder %s63, %s64
      %p78 = scmp.eq.s32.totalorder %s21, 1
      %p79 = por %p77, %p78
      %p81 = scmp.ne.s32.totalorder %s64, %s80
      %p82 = scmp.eq.s32.totalorder %s21, 0
      %p83 = por %p81, %p82
      %s84 = ssub.s32 %s22, %s34
      %s85 = ssub.s32 %s23, %s30
      %s86 = sor.u32 %s84, %s85
      %p87 = scmp.eq.s32.totalorder %s86, 0
      %s89 = sadd.s32 %s88, 1
      %s90 = scalar_select %p87, %s88, %s89
      %p93 = pneg %p87
      %p94 = scmp.eq.s32.totalorder %s15, 1
      %p95 = por %p93, %p94
      %p96 = scmp.ne.s32.totalorder %s88, %s91
      %p97 = scmp.eq.s32.totalorder %s15, 0
      %p98 = por %p96, %p97
      %p99 = scmp.ne.s32.totalorder %s88, %s91
      %p100 = scmp.eq.s32.totalorder %s20, 1
      %p101 = por %p99, %p100
      %p102 = scmp.ne.s32.totalorder %s91, %s92
      %p103 = scmp.eq.s32.totalorder %s20, 0
      %p104 = por %p102, %p103
      %p105 = scmp.ne.s32.totalorder %s91, %s92
      %p106 = scmp.eq.s32.totalorder %s21, 1
      %p107 = por %p105, %p106
      %p109 = scmp.ne.s32.totalorder %s92, %s108
      %p110 = scmp.eq.s32.totalorder %s21, 0
      %p111 = por %p109, %p110
      %p112 = scmp.le.s32.totalorder 1, %s15
      %p113 = scmp.lt.s32.totalorder %s15, 3
      %p114 = pnand %p112, %p113
      %p115 = pneg %p114
      // Predicated region
      $region9: #{tpu_custom_call.1} parent=5 // pred_check
        _
      $region10: #{tpu_custom_call.1} parent=5 // pred_check_branch
        %117 = sbr.rel (%p114) target = $region12
      $region11: #{tpu_custom_call.1} parent=5 // pred_region
        %s118 = ssub.s32 %s15, 1
        // Predicated region
        $region13: #{tpu_custom_call.1} parent=11 // pred_check
          %p119 = pneg %p48
        $region14: #{tpu_custom_call.1} parent=11 // pred_check_branch
          %121 = sbr.rel (%p119) target = $region16
        $region15: #{tpu_custom_call.1} parent=11 // pred_region
          %s123 = ssub.s32 64, 64
          %124 = vsyncadd [#allocation5], %s123
          %127 = dma.hbm_to_smem %s0, 64, [#allocation2], [#allocation5]
        $region16: #{tpu_custom_call.1} parent=11 // pred_fallthru
          _
      $region12: #{tpu_custom_call.1} parent=5 // pred_fallthru
        _
      %p128 = scmp.lt.s32.totalorder %s15, 2
      // Predicated region
      $region17: #{tpu_custom_call.1} parent=5 // pred_check
        %p129 = pneg %p128
      $region18: #{tpu_custom_call.1} parent=5 // pred_check_branch
        %131 = sbr.rel (%p129) target = $region20
      $region19: #{tpu_custom_call.1} parent=5 // pred_region
        // Predicated region
        $region21: #{tpu_custom_call.1} parent=19 // pred_check
          %p132 = pneg %p70
        $region22: #{tpu_custom_call.1} parent=19 // pred_check_branch
          %134 = sbr.rel (%p132) target = $region24
        $region23: #{tpu_custom_call.1} parent=19 // pred_region
          %s135 = sand.u32 %s60, 1
          %s136 = scalar_lea.sflag [#allocation3], %s135
          %s137 = sand.u32 %s60, 1
          %s138 = smul.addr %s137, 8
          %s139 = scalar_lea.vmem [#allocation6], %s138
          %s140 = smul.u32 2, %s23
          %s142 = ssub.s32 128, 128
          %143 = vsyncadd %s136, %s142
          %s144 = smul.addr %s22, 2
          %s145 = sadd.s32 %s140, %s144
          %s146 = smul.addr %s145, 64
          %s147 = scalar_lea.hbm %s1, %s146
          %s149 = sshll.u32 %s139, 4
          %s150 = int_to_ptr.vmem [resolvable:$true] %s149
          %152 = dma.hbm_to_vmem [thread:$0]  %s147, 128, %s150, %s136
        $region24: #{tpu_custom_call.1} parent=19 // pred_fallthru
          _
      $region20: #{tpu_custom_call.1} parent=5 // pred_fallthru
        _
      %p153 = scmp.le.s32.totalorder 1, %s15
      %p154 = scmp.lt.s32.totalorder %s15, 3
      %p155 = pnand %p153, %p154
      %p156 = pneg %p155
      // Predicated region
      $region25: #{tpu_custom_call.1} parent=5 // pred_check
        _
      $region26: #{tpu_custom_call.1} parent=5 // pred_check_branch
        %158 = sbr.rel (%p155) target = $region28
      $region27: #{tpu_custom_call.1} parent=5 // pred_region
        %s159 = ssub.s32 %s15, 1
        // Predicated region
        $region29: #{tpu_custom_call.1} parent=27 // pred_check
          %p160 = pneg %p48
        $region30: #{tpu_custom_call.1} parent=27 // pred_check_branch
          %162 = sbr.rel (%p160) target = $region32
        $region31: #{tpu_custom_call.1} parent=27 // pred_region
          %163 = dma.done [#allocation5], 64
        $region32: #{tpu_custom_call.1} parent=27 // pred_fallthru
          _
        %s164 = sand.u32 %s63, 1
        %s165 = scalar_lea.sflag [#allocation3], %s164
        %s166 = sand.u32 %s63, 1
        %s167 = smul.addr %s166, 8
        %s168 = scalar_lea.vmem [#allocation6], %s167
        // Predicated region
        $region33: #{tpu_custom_call.1} parent=27 // pred_check
          %p169 = pneg %p76
        $region34: #{tpu_custom_call.1} parent=27 // pred_check_branch
          %171 = sbr.rel (%p169) target = $region36
        $region35: #{tpu_custom_call.1} parent=27 // pred_region
          %172 = dma.done %s165, 128
        $region36: #{tpu_custom_call.1} parent=27 // pred_fallthru
          _
        %173 = sfence
        %p174 = pneg %p48
        %p175 = pneg %p45
        %s176 = sand.u32 %s63, 1
        %s177 = scalar_lea.sflag [#allocation3], %s176
        %s178 = sand.u32 %s63, 1
        %s179 = smul.addr %s178, 8
        %s180 = scalar_lea.vmem [#allocation6], %s179
        %p181 = pneg %p76
        %p182 = pneg %p73
        %p183 = pneg %p104
        %p184 = pneg %p101
        %s185 = sand.u32 %s91, 1
        %s186 = scalar_lea.sflag [#allocation4], %s185
        %s187 = sand.u32 %s91, 1
        %s188 = smul.addr %s187, 8
        %s189 = scalar_lea.vmem [#allocation7], %s188
        %s190 = smul.u32 2, %s25
        %s191 = smul.u32 2, %s25
        %v192 = vld [vmem:[%s168] sm:$0xff]
        %s193 = sld [smem:[#allocation2]]
        %v194 = vstv %s193
        %v195 = vmul.f32 %v194, %v192
        %s196 = sld [smem:[#allocation2 + $0x1]]
        %v197 = vstv %s196
        %v198 = vmul.f32 %v197, %v192
        %v200 = vrot.slane %v198, 5
        %v201 = vrot.slane %v200, 4
        %v203 = vadd.f32 %v195, %v201
        %s204 = sld [smem:[#allocation2 + $0x2]]
        %v205 = vstv %s204
        %v206 = vmul.f32 %v205, %v192
        %v208 = vrot.slane %v206, 6
        %v209 = vrot.slane %v208, 4
        %v211 = vadd.f32 %v203, %v209
        %s212 = sld [smem:[#allocation2 + $0x3]]
        %v213 = vstv %s212
        %v214 = vmul.f32 %v213, %v192
        %v216 = vrot.slane %v214, 7
        %v217 = vrot.slane %v216, 4
        %v219 = vadd.f32 %v211, %v217
        %v222 = vunpack.c.l.s4 1966171168
        %v223 = vunpack.c.0.s8 %v222
        %v224 = vlaneseq
        %v225 = vshrl.u32 %v224, 7
        %v226 = vsub.s32 %v223, %v225
        %v227 = vrot.slane %v219, %v226
        %v229 = vunpack.c.l.s4 1966171168
        %v230 = vunpack.c.0.s8 %v229
        %v231 = vlaneseq
        %v232 = vshrl.u32 %v231, 7
        %v233 = vsub.s32 %v230, %v232
        %v234 = vrot.slane %v227, %v233
        %v236 = vlaneseq
        %vm237 = vcmp.ge.s32.totalorder %v236, 0
        %vm238 = vcmp.lt.s32.totalorder %v236, 256
        %vm239 = vmand %vm237, %vm238
        %240 = vst.msk [vmem:[%s189] ss:$4 sm:$0x3] %vm239, %v234
        %s241 = sld [smem:[#allocation2 + $0x80]]
        %v242 = vstv %s241
        %v243 = vmul.f32 %v242, %v192
        %s244 = sld [smem:[#allocation2 + $0x81]]
        %v245 = vstv %s244
        %v246 = vmul.f32 %v245, %v192
        %v248 = vrot.slane %v246, 5
        %v249 = vrot.slane %v248, 4
        %v251 = vadd.f32 %v243, %v249
        %s252 = sld [smem:[#allocation2 + $0x82]]
        %v253 = vstv %s252
        %v254 = vmul.f32 %v253, %v192
        %v256 = vrot.slane %v254, 6
        %v257 = vrot.slane %v256, 4
        %v259 = vadd.f32 %v251, %v257
        %s260 = sld [smem:[#allocation2 + $0x83]]
        %v261 = vstv %s260
        %v262 = vmul.f32 %v261, %v192
        %v264 = vrot.slane %v262, 7
        %v265 = vrot.slane %v264, 4
        %v267 = vadd.f32 %v259, %v265
        %v270 = vunpack.c.l.s4 1966171168
        %v271 = vunpack.c.0.s8 %v270
        %v272 = vlaneseq
        %v273 = vshrl.u32 %v272, 7
        %v274 = vsub.s32 %v271, %v273
        %v275 = vrot.slane %v267, %v274
        %v277 = vunpack.c.l.s4 1966171168
        %v278 = vunpack.c.0.s8 %v277
        %v279 = vlaneseq
        %v280 = vshrl.u32 %v279, 7
        %v281 = vsub.s32 %v278, %v280
        %v282 = vrot.slane %v275, %v281
        %s284 = scalar_lea.vmem %s189, 1 [#allocation7]
        %285 = vst.msk [vmem:[%s284] ss:$4 sm:$0x3] %vm239, %v282
        %s286 = sld [smem:[#allocation2 + $0x100]]
        %v287 = vstv %s286
        %v288 = vmul.f32 %v287, %v192
        %s289 = sld [smem:[#allocation2 + $0x101]]
        %v290 = vstv %s289
        %v291 = vmul.f32 %v290, %v192
        %v293 = vrot.slane %v291, 5
        %v294 = vrot.slane %v293, 4
        %v296 = vadd.f32 %v288, %v294
        %s297 = sld [smem:[#allocation2 + $0x102]]
        %v298 = vstv %s297
        %v299 = vmul.f32 %v298, %v192
        %v301 = vrot.slane %v299, 6
        %v302 = vrot.slane %v301, 4
        %v304 = vadd.f32 %v296, %v302
        %s305 = sld [smem:[#allocation2 + $0x103]]
        %v306 = vstv %s305
        %v307 = vmul.f32 %v306, %v192
        %v309 = vrot.slane %v307, 7
        %v310 = vrot.slane %v309, 4
        %v312 = vadd.f32 %v304, %v310
        %v315 = vunpack.c.l.s4 1966171168
        %v316 = vunpack.c.0.s8 %v315
        %v317 = vlaneseq
        %v318 = vshrl.u32 %v317, 7
        %v319 = vsub.s32 %v316, %v318
        %v320 = vrot.slane %v312, %v319
        %v322 = vunpack.c.l.s4 1966171168
        %v323 = vunpack.c.0.s8 %v322
        %v324 = vlaneseq
        %v325 = vshrl.u32 %v324, 7
        %v326 = vsub.s32 %v323, %v325
        %v327 = vrot.slane %v320, %v326
        %s329 = scalar_lea.vmem %s189, 2 [#allocation7]
        %330 = vst.msk [vmem:[%s329] ss:$4 sm:$0x3] %vm239, %v327
        %s331 = sld [smem:[#allocation2 + $0x180]]
        %v332 = vstv %s331
        %v333 = vmul.f32 %v332, %v192
        %s334 = sld [smem:[#allocation2 + $0x181]]
        %v335 = vstv %s334
        %v336 = vmul.f32 %v335, %v192
        %v338 = vrot.slane %v336, 5
        %v339 = vrot.slane %v338, 4
        %v341 = vadd.f32 %v333, %v339
        %s342 = sld [smem:[#allocation2 + $0x182]]
        %v343 = vstv %s342
        %v344 = vmul.f32 %v343, %v192
        %v346 = vrot.slane %v344, 6
        %v347 = vrot.slane %v346, 4
        %v349 = vadd.f32 %v341, %v347
        %s350 = sld [smem:[#allocation2 + $0x183]]
        %v351 = vstv %s350
        %v352 = vmul.f32 %v351, %v192
        %v354 = vrot.slane %v352, 7
        %v355 = vrot.slane %v354, 4
        %v357 = vadd.f32 %v349, %v355
        %v360 = vunpack.c.l.s4 1966171168
        %v361 = vunpack.c.0.s8 %v360
        %v362 = vlaneseq
        %v363 = vshrl.u32 %v362, 7
        %v364 = vsub.s32 %v361, %v363
        %v365 = vrot.slane %v357, %v364
        %v367 = vunpack.c.l.s4 1966171168
        %v368 = vunpack.c.0.s8 %v367
        %v369 = vlaneseq
        %v370 = vshrl.u32 %v369, 7
        %v371 = vsub.s32 %v368, %v370
        %v372 = vrot.slane %v365, %v371
        %s374 = scalar_lea.vmem %s189, 3 [#allocation7]
        %375 = vst.msk [vmem:[%s374] ss:$4 sm:$0x3] %vm239, %v372
        %s376 = sand.u32 %s91, 1
        %s377 = scalar_lea.sflag [#allocation4], %s376
        %s378 = sand.u32 %s91, 1
        %s379 = smul.addr %s378, 8
        %s380 = scalar_lea.vmem [#allocation7], %s379
        // Predicated region
        $region37: #{tpu_custom_call.1} parent=27 // pred_check
          %p381 = pneg %p101
        $region38: #{tpu_custom_call.1} parent=27 // pred_check_branch
          %383 = sbr.rel (%p381) target = $region40
        $region39: #{tpu_custom_call.1} parent=27 // pred_region
          %s384 = smul.u32 2, %s25
          %s386 = ssub.s32 128, 128
          %387 = vsyncadd %s377, %s386
          %s388 = smul.addr %s24, 2
          %s389 = sadd.s32 %s384, %s388
          %s390 = smul.addr %s389, 64
          %s391 = scalar_lea.hbm %s2, %s390
          %s393 = sshll.u32 %s380, 4
          %s394 = int_to_ptr.vmem [resolvable:$true] %s393
          %396 = dma.vmem_to_hbm [thread:$0]  %s394, 128, %s391, %s377
        $region40: #{tpu_custom_call.1} parent=27 // pred_fallthru
          _
      $region28: #{tpu_custom_call.1} parent=5 // pred_fallthru
        _
      %p397 = scmp.le.s32.totalorder 2, %s15
      // Predicated region
      $region41: #{tpu_custom_call.1} parent=5 // pred_check
        %p398 = pneg %p397
      $region42: #{tpu_custom_call.1} parent=5 // pred_check_branch
        %400 = sbr.rel (%p398) target = $region44
      $region43: #{tpu_custom_call.1} parent=5 // pred_region
        %s401 = ssub.s32 %s15, 2
        // Predicated region
        $region45: #{tpu_custom_call.1} parent=43 // pred_check
          %p402 = pneg %p107
        $region46: #{tpu_custom_call.1} parent=43 // pred_check_branch
          %404 = sbr.rel (%p402) target = $region48
        $region47: #{tpu_custom_call.1} parent=43 // pred_region
          %s405 = sand.u32 %s92, 1
          %s406 = scalar_lea.sflag [#allocation4], %s405
          %s407 = sand.u32 %s92, 1
          %s408 = smul.addr %s407, 8
          %s409 = scalar_lea.vmem [#allocation7], %s408
          %410 = dma.done %s406, 128
        $region48: #{tpu_custom_call.1} parent=43 // pred_fallthru
          _
      $region44: #{tpu_custom_call.1} parent=5 // pred_fallthru
        _
    $region6: #{tpu_custom_call.1} parent=1 // loop_footer
      %s19 = sadd.s32 1, %s15
    $region7: #{tpu_custom_call.1} parent=1 // loop_footer_branch
      %14 = sbr.rel target = $region3
    $region8: #{tpu_custom_call.1} parent=1 // loop_exit
      _
    %411 = vsyncpa [#allocation3], 1
    %s412 = scalar_lea.sflag [#allocation3], 1
    %413 = vsyncpa %s412, 1
    %414 = vsyncpa [#allocation4], 1
    %s415 = scalar_lea.sflag [#allocation4], 1
    %416 = vsyncpa %s415, 1
    %417 = vsyncpa [#allocation5], 1
    %s418 = scalar_lea.sflag [#allocation5], 1
    %419 = vsyncpa %s418, 1

</llo_original>
